<compile_context>
chip_gen: v5e
topology: v5e:2x2
jax: 0.10.0
libtpu: 0.0.40
codegen_flags: <defaults>
</compile_context>

<pallas_src>
import math

import jax
import jax.numpy as jnp
from jax import lax
from jax.experimental import pallas as pl
from jax.experimental.pallas import tpu as pltpu

BN_EPS = 1e-5
LANE = 128


def _round_up(x, m):
    return (x + m - 1) // m * m


def _vmem_budget_bytes():
    """Generation-aware VMEM budget: ~3/4 of physical (48 MiB v7x, 96 MiB v5e/v6e)."""
    cap = 64 * 1024 * 1024  # conservative fallback (fits every generation)
    try:
        cap = int(pltpu.get_tpu_info().vmem_capacity_bytes)
    except Exception:
        pass
    return (cap * 3) // 4


def _pick_tile(npool, K, Cp, y_mode, out_bytes, vmem_budget):
    """Largest TN (multiple of 8) whose double-buffered per-step working set fits."""
    resident = 2 * K * Cp * 2 + 4 * Cp * 4 + (2 << 20)   # weights (2 bufs) + scale/shift + slack
    per_row = (2 * 4 * K * 2          # patches tile, bf16, double-buffered
               + 4 * Cp * 4           # f32 matmul result / temporaries
               + 2 * Cp * out_bytes)  # pooled output tile, double-buffered
    if y_mode:
        per_row += 2 * 4 * Cp * 2     # pre-BN y tile (bf16), double-buffered
    cap = max(8, _round_up((npool + 1) // 2, 8))          # keep the 2-way pass-A split cheap
    for tn in (1024, 768, 512, 384, 256, 192, 128, 96, 64, 48, 32, 24, 16, 8):
        if tn > cap:
            continue
        if resident + tn * per_row <= vmem_budget:
            return tn
    return 8


# ---------------------------------------------------------------------------- kernels

def _conv_dot(patches_ref, w_ref):
    """(4,TN,K) x (K,Cp) -> (4*TN,Cp) f32: a single fused MXU matmul per grid step."""
    p4, tn, k = patches_ref.shape
    x = patches_ref[...].reshape(p4 * tn, k)              # leading-dim merge: layout free
    return jnp.dot(x, w_ref[...], preferred_element_type=jnp.float32)


def _accum_stats(y, sum_ref, sq_ref):
    rows, cp = y.shape
    yg = y.reshape(rows // 8, 8, cp)                      # sublane-aligned split: layout free
    sum_ref[...] += jnp.sum(yg, axis=0)                   # (8, Cp) partial sums per core
    sq_ref[...] += jnp.sum(yg * yg, axis=0)


def _stats_kernel(patches_ref, w_ref, sum_ref, sq_ref):
    """Pass A (re-matmul mode): per-channel sum / sum-of-squares of the conv output."""
    @pl.when(pl.program_id(1) == 0)
    def _():
        sum_ref[...] = jnp.zeros_like(sum_ref)
        sq_ref[...] = jnp.zeros_like(sq_ref)
    y = _conv_dot(patches_ref, w_ref)
    _accum_stats(y, sum_ref, sq_ref)


def _stats_y_kernel(patches_ref, w_ref, sum_ref, sq_ref, y_ref):
    """Pass A (y-store mode): stats + write the pre-BN conv output y (bf16)."""
    @pl.when(pl.program_id(1) == 0)
    def _():
        sum_ref[...] = jnp.zeros_like(sum_ref)
        sq_ref[...] = jnp.zeros_like(sq_ref)
    y = _conv_dot(patches_ref, w_ref)
    _accum_stats(y, sum_ref, sq_ref)
    rows, cp = y.shape
    y_ref[...] = y.reshape(4, rows // 4, cp).astype(y_ref.dtype)


def _norm_pool_kernel(patches_ref, w_ref, scale_ref, shift_ref, o_ref):
    """Pass B (re-matmul mode): conv matmul + fused BN affine + MaxPool2d(2) + ReLU."""
    y = _conv_dot(patches_ref, w_ref)
    rows, cp = y.shape
    y = y.reshape(4, rows // 4, cp) * scale_ref[...] + shift_ref[...]
    o_ref[...] = jnp.maximum(jnp.max(y, axis=0), 0.0).astype(o_ref.dtype)


def _finish_from_y_kernel(y_ref, scale_ref, shift_ref, o_ref):
    """Pass B (y-store mode): BN affine + MaxPool2d(2) + ReLU — no matmul."""
    y = y_ref[...].astype(jnp.float32) * scale_ref[...] + shift_ref[...]
    o_ref[...] = jnp.maximum(jnp.max(y, axis=0), 0.0).astype(o_ref.dtype)


# ---------------------------------------------------------------------------- wrapper

def conv_block_forward(x_nchw, weight, bias, gamma, beta, *,
                       tile_npool=None, out_dtype=jnp.float32):
    """ConvBlock(indim, outdim, pool=True, padding=1).forward(x); x is NCHW f32.

    Set out_dtype=jnp.bfloat16 to halve the output store bandwidth if the consumer
    (e.g. the next ConvBlock) casts to bf16 anyway.
    """
    del bias  # exactly cancelled by the BN (train-mode) mean subtraction
    N, Cin, H, W = x_nchw.shape
    Cout = weight.shape[0]
    assert H % 2 == 0 and W % 2 == 0, "MaxPool2d(2) path assumes even spatial dims"

    K = 9 * Cin
    Hp, Wp = H // 2, W // 2
    Npool = N * Hp * Wp
    Cp = max(LANE, _round_up(Cout, LANE))          # lane-dense output / MXU N dim
    out_bytes = jnp.dtype(out_dtype).itemsize
    y_mode = K > 2 * Cp                            # store y in pass A instead of re-matmul

    # ---- glue: im2col in bf16, kept as (4, Npool, K) end to end (plain JAX) ----
    # TODO(synk): replace host-side im2col with in-kernel shifted-window matmuls
    # (9 accumulated (TN,Cin)@(Cin,Cp) products with a 1-row halo DMA) to cut conv
    # HBM traffic from ~9x the input down to ~2x.
    x = jnp.transpose(x_nchw, (0, 2, 3, 1)).astype(jnp.bfloat16)   # NHWC bf16
    xp = jnp.pad(x, ((0, 0), (1, 1), (1, 1), (0, 0)))              # padding=1
    cols = [xp[:, kh:kh + H, kw:kw + W, :] for kh in range(3) for kw in range(3)]
    patches = jnp.concatenate(cols, axis=-1)                       # (N, H, W, K)
    patches = patches.reshape(N, Hp, 2, Wp, 2, K)
    patches = patches.transpose(2, 4, 0, 1, 3, 5).reshape(4, Npool, K)

    # conv weight (Cout, Cin, 3, 3) -> (K=(kh,kw,cin), Cp) bf16, zero-padded channels
    wmat = jnp.transpose(weight, (2, 3, 1, 0)).reshape(K, Cout)
    wmat = jnp.pad(wmat, ((0, 0), (0, Cp - Cout))).astype(jnp.bfloat16)

    vmem_budget = _vmem_budget_bytes()
    TN = (_pick_tile(Npool, K, Cp, y_mode, out_bytes, vmem_budget)
          if tile_npool is None else int(tile_npool))
    assert TN >= 8 and TN % 8 == 0, "tile must be a multiple of 8"
    Np_pad = _round_up(Npool, 2 * TN)   # multiple of 2*TN so pass A splits evenly on 2 cores
    if Np_pad != Npool:
        # zero rows contribute 0 to both sum and sum-of-squares -> stats stay exact
        patches = jnp.pad(patches, ((0, 0), (0, Np_pad - Npool), (0, 0)))
    nt = Np_pad // TN
    nt2 = nt // 2

    # ---- pass A: BN batch statistics (+ pre-BN y in y_mode), 2-way core split ----
    patches_spec_a = pl.BlockSpec((4, TN, K), lambda c, i: (0, c * nt2 + i, 0))
    w_spec_a = pl.BlockSpec((K, Cp), lambda c, i: (0, 0))            # grid-resident
    # TODO(synk): request single-buffering (pl.Buffered(1)) for the resident weight
    # spec when K is large to reclaim VMEM headroom on v7x.
    stats_spec = pl.BlockSpec((None, 8, Cp), lambda c, i: (c, 0, 0))  # per-core accumulator
    stats_shape = jax.ShapeDtypeStruct((2, 8, Cp), jnp.float32)
    cparams_a = pltpu.CompilerParams(
        dimension_semantics=("parallel", "arbitrary"),
        vmem_limit_bytes=vmem_budget)

    flops_a = 2 * 4 * Np_pad * K * Cp
    bytes_a = 4 * Np_pad * K * 2 + K * Cp * 2 + 2 * 2 * 8 * Cp * 4
    if y_mode:
        bytes_a += 4 * Np_pad * Cp * 2
        s2, ss2, y_pre = pl.pallas_call(
            _stats_y_kernel,
            grid=(2, nt2),
            in_specs=[patches_spec_a, w_spec_a],
            out_specs=[stats_spec, stats_spec,
                       pl.BlockSpec((4, TN, Cp), lambda c, i: (0, c * nt2 + i, 0))],
            out_shape=[stats_shape, stats_shape,
                       jax.ShapeDtypeStruct((4, Np_pad, Cp), jnp.bfloat16)],
            compiler_params=cparams_a,
            cost_estimate=pl.CostEstimate(
                flops=int(flops_a), transcendentals=0, bytes_accessed=int(bytes_a)),
        )(patches, wmat)
    else:
        s2, ss2 = pl.pallas_call(
            _stats_kernel,
            grid=(2, nt2),
            in_specs=[patches_spec_a, w_spec_a],
            out_specs=[stats_spec, stats_spec],
            out_shape=[stats_shape, stats_shape],
            compiler_params=cparams_a,
            cost_estimate=pl.CostEstimate(
                flops=int(flops_a), transcendentals=0, bytes_accessed=int(bytes_a)),
        )(patches, wmat)

    # ---- fold BN into a single scale/shift (tiny, XLA side) ----
    # NOTE: E[y^2]-E[y]^2 in f32 can cancel when |mean| >> std; acceptable for
    # roughly zero-mean conv activations.  TODO(synk): shifted/Welford accumulation
    # if this kernel is reused where the conv-output mean dominates its std.
    M_elems = jnp.float32(4 * Npool)                       # = N*H*W samples per channel
    s = jnp.sum(s2, axis=(0, 1)).reshape(1, Cp)
    ss = jnp.sum(ss2, axis=(0, 1)).reshape(1, Cp)
    mu = s / M_elems
    var = jnp.maximum(ss / M_elems - mu * mu, 0.0)         # biased variance (F.batch_norm)
    gamma_p = jnp.pad(gamma.astype(jnp.float32), (0, Cp - Cout)).reshape(1, Cp)
    beta_p = jnp.pad(beta.astype(jnp.float32), (0, Cp - Cout)).reshape(1, Cp)
    scale = gamma_p * lax.rsqrt(var + BN_EPS)
    shift = beta_p - mu * scale

    # ---- pass B: BN affine + MaxPool2d(2) + ReLU (megacore "parallel") ----
    out_shape = jax.ShapeDtypeStruct((Np_pad, Cp), out_dtype)
    out_spec = pl.BlockSpec((TN, Cp), lambda i: (i, 0))
    vec_spec = pl.BlockSpec((1, Cp), lambda i: (0, 0))
    cparams_b = pltpu.CompilerParams(
        dimension_semantics=("parallel",), vmem_limit_bytes=vmem_budget)

    if y_mode:
        flops_b = 4 * Np_pad * Cp * 3
        bytes_b = 4 * Np_pad * Cp * 2 + Np_pad * Cp * out_bytes + 2 * 2 * Cp * 4
        out = pl.pallas_call(
            _finish_from_y_kernel,
            grid=(nt,),
            in_specs=[pl.BlockSpec((4, TN, Cp), lambda i: (0, i, 0)), vec_spec, vec_spec],
            out_specs=out_spec,
            out_shape=out_shape,
            compiler_params=cparams_b,
            cost_estimate=pl.CostEstimate(
                flops=int(flops_b), transcendentals=0, bytes_accessed=int(bytes_b)),
        )(y_pre, scale, shift)
    else:
        flops_b = 2 * 4 * Np_pad * K * Cp
        bytes_b = 4 * Np_pad * K * 2 + K * Cp * 2 + Np_pad * Cp * out_bytes + 2 * 2 * Cp * 4
        out = pl.pallas_call(
            _norm_pool_kernel,
            grid=(nt,),
            in_specs=[pl.BlockSpec((4, TN, K), lambda i: (0, i, 0)),
                      pl.BlockSpec((K, Cp), lambda i: (0, 0)),
                      vec_spec, vec_spec],
            out_specs=out_spec,
            out_shape=out_shape,
            compiler_params=cparams_b,
            cost_estimate=pl.CostEstimate(
                flops=int(flops_b), transcendentals=0, bytes_accessed=int(bytes_b)),
        )(patches, wmat, scale, shift)

    # ---- glue: drop padding, back to NCHW f32 (module semantics) ----
    out = out[:Npool, :Cout].astype(jnp.float32).reshape(N, Hp, Wp, Cout)
    return jnp.transpose(out, (0, 3, 1, 2))                # (N, Cout, H/2, W/2)


def _reference(x_nchw, weight, bias, gamma, beta):
    """Pure-JAX f32 reference mirroring the PyTorch forward (for validation)."""
    y = lax.conv_general_dilated(
        x_nchw, weight, window_strides=(1, 1), padding=((1, 1), (1, 1)),
        dimension_numbers=("NCHW", "OIHW", "NCHW"))
    y = y + bias[None, :, None, None]
    mu = y.mean(axis=(0, 2, 3), keepdims=True)
    var = ((y - mu) ** 2).mean(axis=(0, 2, 3), keepdims=True)
    y = (y - mu) / jnp.sqrt(var + BN_EPS)
    y = y * gamma[None, :, None, None] + beta[None, :, None, None]
    y = jnp.maximum(y, 0.0)
    N, C, H, W = y.shape
    return y.reshape(N, C, H // 2, 2, W // 2, 2).max(axis=(3, 5))


if __name__ == "__main__":
    key = jax.random.PRNGKey(0)
    k1, k2, k3, k4, k5 = jax.random.split(key, 5)

    # Case 1: small Cin (K <= 2*Cp) -> re-matmul pass-B path; multi-tile accumulation.
    N, indim, outdim, H, W = 2, 4, 8, 16, 16
    x = jax.random.normal(k1, (N, indim, H, W), dtype=jnp.float32)
    n_fan = 3 * 3 * outdim                       # init_layer(Conv2d)
    weight = jax.random.normal(k2, (outdim, indim, 3, 3), jnp.float32) * math.sqrt(2.0 / n_fan)
    bias = jax.random.normal(k3, (outdim,), jnp.float32) * 0.1
    gamma = jnp.ones((outdim,), jnp.float32)     # init_layer(BatchNorm2d)
    beta = jnp.zeros((outdim,), jnp.float32)

    out = jax.block_until_ready(conv_block_forward(x, weight, bias, gamma, beta, tile_npool=32))
    ref = jax.block_until_ready(_reference(x, weight, bias, gamma, beta))
    assert out.shape == (N, outdim, H // 2, W // 2), out.shape
    # bf16 matmul operands vs f32 reference -> loose-ish tolerance (documented above).
    assert jnp.allclose(out, ref, atol=2e-2, rtol=2e-2), float(jnp.max(jnp.abs(out - ref)))

    # Case 2: larger Cin (K = 288 > 2*Cp) -> pass A stores y, pass B skips the re-matmul.
    N2, indim2, outdim2, H2, W2 = 2, 32, 8, 8, 8
    x2 = jax.random.normal(k4, (N2, indim2, H2, W2), jnp.float32)
    n_fan2 = 3 * 3 * outdim2
    w2 = jax.random.normal(k5, (outdim2, indim2, 3, 3), jnp.float32) * math.sqrt(2.0 / n_fan2)
    b2 = jnp.zeros((outdim2,), jnp.float32)
    g2 = jnp.ones((outdim2,), jnp.float32)
    bt2 = jnp.zeros((outdim2,), jnp.float32)

    out2 = jax.block_until_ready(conv_block_forward(x2, w2, b2, g2, bt2))
    ref2 = jax.block_until_ready(_reference(x2, w2, b2, g2, bt2))
    assert out2.shape == (N2, outdim2, H2 // 2, W2 // 2), out2.shape
    assert jnp.allclose(out2, ref2, atol=3e-2, rtol=3e-2), float(jnp.max(jnp.abs(out2 - ref2)))

    print("KERNEL_OK")
</pallas_src>

<mosaic_0001>
module attributes {stable_mosaic.version = 11 : i64} {
  func.func @_stats_kernel(%arg0: i32, %arg1: i32, %arg2: memref<4x32x36xbf16, #tpu.memory_space<vmem>>, %arg3: memref<36x128xbf16, #tpu.memory_space<vmem>>, %arg4: memref<1x8x128xf32, #tpu.memory_space<vmem>>, %arg5: memref<1x8x128xf32, #tpu.memory_space<vmem>>) attributes {dimension_semantics = [#tpu.dimension_semantics<parallel>, #tpu.dimension_semantics<arbitrary>], iteration_bounds = array<i64: 2, 2>, scalar_prefetch = 0 : i64, scratch_operands = 0 : i64, tpu.core_type = #tpu.core_type<tc>, window_params = [{transform_indices = @transform_0, window_bounds = array<i64: 4, 32, 36>}, {pipeline_mode = #tpu.pipeline_mode<synchronous>, transform_indices = @transform_1, window_bounds = array<i64: 36, 128>}, {transform_indices = @transform_2, window_bounds = array<i64: 1, 8, 128>}, {transform_indices = @transform_3, window_bounds = array<i64: 1, 8, 128>}]} {
    %c0_i32 = arith.constant 0 : i32
    %0 = arith.cmpi eq, %arg1, %c0_i32 : i32
    %1 = arith.extui %0 : i1 to i32
    %c0_i32_0 = arith.constant 0 : i32
    %2 = arith.cmpi ne, %1, %c0_i32_0 : i32
    scf.if %2 {
      %cst_19 = arith.constant 0.000000e+00 : f32
      %23 = vector.broadcast %cst_19 : f32 to vector<8x128xf32>
      %c0_20 = arith.constant 0 : index
      %c0_21 = arith.constant 0 : index
      %c0_22 = arith.constant 0 : index
      %24 = vector.load %arg4[%c0_20, %c0_21, %c0_22] : memref<1x8x128xf32, #tpu.memory_space<vmem>>, vector<1x8x128xf32>
      %25 = vector.shape_cast %24 : vector<1x8x128xf32> to vector<8x128xf32>
      %26 = vector.shape_cast %23 : vector<8x128xf32> to vector<1x8x128xf32>
      tpu.vector_store %arg4[%c0_20, %c0_21, %c0_22], %26 {strides = array<i32>} : memref<1x8x128xf32, #tpu.memory_space<vmem>>, vector<1x8x128xf32>,
      %cst_23 = arith.constant 0.000000e+00 : f32
      %27 = vector.broadcast %cst_23 : f32 to vector<8x128xf32>
      %c0_24 = arith.constant 0 : index
      %c0_25 = arith.constant 0 : index
      %c0_26 = arith.constant 0 : index
      %28 = vector.load %arg5[%c0_24, %c0_25, %c0_26] : memref<1x8x128xf32, #tpu.memory_space<vmem>>, vector<1x8x128xf32>
      %29 = vector.shape_cast %28 : vector<1x8x128xf32> to vector<8x128xf32>
      %30 = vector.shape_cast %27 : vector<8x128xf32> to vector<1x8x128xf32>
      tpu.vector_store %arg5[%c0_24, %c0_25, %c0_26], %30 {strides = array<i32>} : memref<1x8x128xf32, #tpu.memory_space<vmem>>, vector<1x8x128xf32>,
    } else {
    }
    %c0 = arith.constant 0 : index
    %c0_1 = arith.constant 0 : index
    %c0_2 = arith.constant 0 : index
    %3 = vector.load %arg2[%c0, %c0_1, %c0_2] : memref<4x32x36xbf16, #tpu.memory_space<vmem>>, vector<4x32x36xbf16>
    %4 = vector.shape_cast %3 : vector<4x32x36xbf16> to vector<128x36xbf16>
    %c0_3 = arith.constant 0 : index
    %c0_4 = arith.constant 0 : index
    %5 = vector.load %arg3[%c0_3, %c0_4] : memref<36x128xbf16, #tpu.memory_space<vmem>>, vector<36x128xbf16>
    %cst = arith.constant dense<0.000000e+00> : vector<128x128xf32>
    %6 = tpu.matmul %4, %5, %cst {dimension_numbers = #tpu.dot_dimension_numbers<[1], [0], [0], [1], [0, 0, 1, 1], [], []>} : vector<128x36xbf16>, vector<36x128xbf16>, vector<128x128xf32> -> vector<128x128xf32>
    %7 = vector.shape_cast %6 : vector<128x128xf32> to vector<16x8x128xf32>
    %c0_5 = arith.constant 0 : index
    %c0_6 = arith.constant 0 : index
    %c0_7 = arith.constant 0 : index
    %8 = vector.load %arg4[%c0_5, %c0_6, %c0_7] : memref<1x8x128xf32, #tpu.memory_space<vmem>>, vector<1x8x128xf32>
    %9 = vector.shape_cast %8 : vector<1x8x128xf32> to vector<8x128xf32>
    %cst_8 = arith.constant dense<0.000000e+00> : vector<8x128xf32>
    %10 = vector.multi_reduction <add>, %7, %cst_8 [0] : vector<16x8x128xf32> to vector<8x128xf32>
    %11 = arith.addf %9, %10 : vector<8x128xf32>
    %c0_9 = arith.constant 0 : index
    %c0_10 = arith.constant 0 : index
    %c0_11 = arith.constant 0 : index
    %12 = vector.load %arg4[%c0_9, %c0_10, %c0_11] : memref<1x8x128xf32, #tpu.memory_space<vmem>>, vector<1x8x128xf32>
    %13 = vector.shape_cast %12 : vector<1x8x128xf32> to vector<8x128xf32>
    %14 = vector.shape_cast %11 : vector<8x128xf32> to vector<1x8x128xf32>
    tpu.vector_store %arg4[%c0_9, %c0_10, %c0_11], %14 {strides = array<i32>} : memref<1x8x128xf32, #tpu.memory_space<vmem>>, vector<1x8x128xf32>,
    %c0_12 = arith.constant 0 : index
    %c0_13 = arith.constant 0 : index
    %c0_14 = arith.constant 0 : index
    %15 = vector.load %arg5[%c0_12, %c0_13, %c0_14] : memref<1x8x128xf32, #tpu.memory_space<vmem>>, vector<1x8x128xf32>
    %16 = vector.shape_cast %15 : vector<1x8x128xf32> to vector<8x128xf32>
    %17 = arith.mulf %7, %7 : vector<16x8x128xf32>
    %cst_15 = arith.constant dense<0.000000e+00> : vector<8x128xf32>
    %18 = vector.multi_reduction <add>, %17, %cst_15 [0] : vector<16x8x128xf32> to vector<8x128xf32>
    %19 = arith.addf %16, %18 : vector<8x128xf32>
    %c0_16 = arith.constant 0 : index
    %c0_17 = arith.constant 0 : index
    %c0_18 = arith.constant 0 : index
    %20 = vector.load %arg5[%c0_16, %c0_17, %c0_18] : memref<1x8x128xf32, #tpu.memory_space<vmem>>, vector<1x8x128xf32>
    %21 = vector.shape_cast %20 : vector<1x8x128xf32> to vector<8x128xf32>
    %22 = vector.shape_cast %19 : vector<8x128xf32> to vector<1x8x128xf32>
    tpu.vector_store %arg5[%c0_16, %c0_17, %c0_18], %22 {strides = array<i32>} : memref<1x8x128xf32, #tpu.memory_space<vmem>>, vector<1x8x128xf32>,
    return
  }
  func.func @transform_0(%arg0: i32, %arg1: i32) -> (i32, i32, i32) {
    %c2_i32 = arith.constant 2 : i32
    %0 = arith.muli %arg0, %c2_i32 : i32
    %1 = arith.addi %0, %arg1 : i32
    %c0_i32 = arith.constant 0 : i32
    %c0_i32_0 = arith.constant 0 : i32
    %c0_i32_1 = arith.constant 0 : i32
    return %c0_i32, %1, %c0_i32_0 : i32, i32, i32
  }
  func.func @transform_1(%arg0: i32, %arg1: i32) -> (i32, i32) {
    %c0_i32 = arith.constant 0 : i32
    %c0_i32_0 = arith.constant 0 : i32
    %c0_i32_1 = arith.constant 0 : i32
    return %c0_i32, %c0_i32_0 : i32, i32
  }
  func.func @transform_2(%arg0: i32, %arg1: i32) -> (i32, i32, i32) {
    %c0_i32 = arith.constant 0 : i32
    %c0_i32_0 = arith.constant 0 : i32
    %c0_i32_1 = arith.constant 0 : i32
    return %arg0, %c0_i32, %c0_i32_0 : i32, i32, i32
  }
  func.func @transform_3(%arg0: i32, %arg1: i32) -> (i32, i32, i32) {
    %c0_i32 = arith.constant 0 : i32
    %c0_i32_0 = arith.constant 0 : i32
    %c0_i32_1 = arith.constant 0 : i32
    return %arg0, %c0_i32, %c0_i32_0 : i32, i32, i32
  }
}

</mosaic_0001>

<llo_original>
// kernel: tpu_custom_call.1
$region0: #{tpu_custom_call.1}
  #allocation0 [shape = 'u32[]', space=smem, size = 0x4, offset = 0x4, fixed_abs, tag = 'smem constant byte address 0x4 - core index']
  #allocation1 [shape = 'u32[72,128]{1,0:T(1,128)}', space=vmem, size = 0x9000, scoped, tag = 'internal scratch']
  %s0 = inlined_call_operand.vmem [shape: bf16[4,128,36], index: 0, kind: input, shape index: {}]
  %s1 = inlined_call_operand.vmem [shape: bf16[36,128], index: 1, kind: input, shape index: {}]
  %s2 = inlined_call_operand.hbm [shape: f32[2,8,128], index: 2, kind: output, shape index: {0}]
  %s3 = inlined_call_operand.hbm [shape: f32[2,8,128], index: 3, kind: output, shape index: {1}]
  %4 = xla_tuple %s2, %s3
  %s5 = sld [smem:[#allocation0]]
  $region94: #{tpu_custom_call.1} parent=0
    _
  %s7 = ssub.s32 1, %s5
  %s8 = scalar_select 0, %s7, %s5
  $region1: #{tpu_custom_call.1} parent=0
    #allocation2 [shape = 'u8[65536]{0}', space=vmem, size = 0x10000, scoped, tag = 'input window, operand 0']
    #allocation3 [shape = 'u8[8192]{0}', space=vmem, size = 0x2000, scoped, tag = 'output window, operand 0']
    #allocation4 [shape = 's32[2]{0}', space=sflag, size = 0x8, scoped, tag = 'scoped memory for tpu_custom_call.1']
    #allocation5 [shape = 'u8[8192]{0}', space=vmem, size = 0x2000, scoped, tag = 'output window, operand 1']
    #allocation6 [shape = 's32[2]{0}', space=sflag, size = 0x8, scoped, tag = 'scoped memory for tpu_custom_call.1']
    %9 = vsyncpa [#allocation4], 0
    %s10 = scalar_lea.sflag [#allocation4], 1
    %11 = vsyncpa %s10, 0
    %12 = vsyncpa [#allocation6], 0
    %s13 = scalar_lea.sflag [#allocation6], 1
    %14 = vsyncpa %s13, 0
    loop: start=0, step=1, limit=6
    $region2: #{tpu_custom_call.1} parent=1 // loop_pre_header
      _
    $region3: #{tpu_custom_call.1} parent=1 // loop_header
      %s16 = sphi 0, %s20
      %p17 = scmp.ge.s32.totalorder %s16, 6
      %s23 = sphi 0, %s35
      %s24 = sphi 0, %s31
      %s25 = sphi 0, %s23
      %s26 = sphi 0, %s24
      %s27 = sphi 0, %s25
      %s28 = sphi 0, %s26
      %s42 = sphi 0, %s44
      %s45 = sphi 0, %s42
      %s46 = sphi 0, %s45
      %s62 = sphi 0, %s46
      %s66 = sphi 0, %s66
      %s68 = sphi 0, %s66
      %s69 = sphi 0, %s68
      %s83 = sphi 0, %s69
      %s89 = sphi 0, %s91
      %s92 = sphi 0, %s89
      %s93 = sphi 0, %s92
      %s109 = sphi 0, %s93
      %s115 = sphi 0, %s117
      %s118 = sphi 0, %s115
      %s119 = sphi 0, %s118
      %s135 = sphi 0, %s119
    $region4: #{tpu_custom_call.1} parent=1 // loop_header_branch
      %19 = sbr.rel (%p17) target = $region8
    $region5: #{tpu_custom_call.1} parent=1 // loop_body
      %s21 = ssub.s32 %s16, 1
      %s22 = ssub.s32 %s16, 2
      %s29 = sadd.s32 1, %s24
      %p30 = scmp.ge.s32.totalorder %s29, 2
      %s31 = scalar_select %p30, 0, %s29
      %s32 = sadd.s32 1, %s23
      %s33 = scalar_select %p30, %s32, %s23
      %p34 = scmp.ge.s32.totalorder %s33, 2
      %s35 = scalar_select %p34, 0, %s33
      %s36 = smul.u32 %s23, 2
      %s37 = sadd.s32 %s36, %s24
      %s38 = smul.u32 %s35, 2
      %s39 = sadd.s32 %s38, %s31
      %s40 = ssub.s32 %s37, %s39
      %p41 = scmp.eq.s32.totalorder %s40, 0
      %s43 = sadd.s32 %s42, 1
      %s44 = scalar_select %p41, %s42, %s43
      %p47 = pneg %p41
      %p48 = scmp.eq.s32.totalorder %s16, 3
      %p49 = por %p47, %p48
      %p50 = scmp.ne.s32.totalorder %s42, %s45
      %p51 = scmp.eq.s32.totalorder %s16, 0
      %p52 = por %p50, %p51
      %p53 = scmp.ne.s32.totalorder %s42, %s45
      %p54 = scmp.eq.s32.totalorder %s21, 3
      %p55 = por %p53, %p54
      %p56 = scmp.ne.s32.totalorder %s45, %s46
      %p57 = scmp.eq.s32.totalorder %s21, 0
      %p58 = por %p56, %p57
      %p59 = scmp.ne.s32.totalorder %s45, %s46
      %p60 = scmp.eq.s32.totalorder %s22, 3
      %p61 = por %p59, %p60
      %p63 = scmp.ne.s32.totalorder %s46, %s62
      %p64 = scmp.eq.s32.totalorder %s22, 0
      %p65 = por %p63, %p64
      %s67 = sadd.s32 %s66, 1
      %p70 = scmp.eq.s32.totalorder %s16, 3
      %p71 = scmp.ne.s32.totalorder %s66, %s68
      %p72 = scmp.eq.s32.totalorder %s16, 0
      %p73 = por %p71, %p72
      %p74 = scmp.ne.s32.totalorder %s66, %s68
      %p75 = scmp.eq.s32.totalorder %s21, 3
      %p76 = por %p74, %p75
      %p77 = scmp.ne.s32.totalorder %s68, %s69
      %p78 = scmp.eq.s32.totalorder %s21, 0
      %p79 = por %p77, %p78
      %p80 = scmp.ne.s32.totalorder %s68, %s69
      %p81 = scmp.eq.s32.totalorder %s22, 3
      %p82 = por %p80, %p81
      %p84 = scmp.ne.s32.totalorder %s69, %s83
      %p85 = scmp.eq.s32.totalorder %s22, 0
      %p86 = por %p84, %p85
      %s87 = ssub.s32 %s23, %s35
      %p88 = scmp.eq.s32.totalorder %s87, 0
      %s90 = sadd.s32 %s89, 1
      %s91 = scalar_select %p88, %s89, %s90
      %p94 = pneg %p88
      %p95 = scmp.eq.s32.totalorder %s16, 3
      %p96 = por %p94, %p95
      %p97 = scmp.ne.s32.totalorder %s89, %s92
      %p98 = scmp.eq.s32.totalorder %s16, 0
      %p99 = por %p97, %p98
      %p100 = scmp.ne.s32.totalorder %s89, %s92
      %p101 = scmp.eq.s32.totalorder %s21, 3
      %p102 = por %p100, %p101
      %p103 = scmp.ne.s32.totalorder %s92, %s93
      %p104 = scmp.eq.s32.totalorder %s21, 0
      %p105 = por %p103, %p104
      %p106 = scmp.ne.s32.totalorder %s92, %s93
      %p107 = scmp.eq.s32.totalorder %s22, 3
      %p108 = por %p106, %p107
      %p110 = scmp.ne.s32.totalorder %s93, %s109
      %p111 = scmp.eq.s32.totalorder %s22, 0
      %p112 = por %p110, %p111
      %s113 = ssub.s32 %s23, %s35
      %p114 = scmp.eq.s32.totalorder %s113, 0
      %s116 = sadd.s32 %s115, 1
      %s117 = scalar_select %p114, %s115, %s116
      %p120 = pneg %p114
      %p121 = scmp.eq.s32.totalorder %s16, 3
      %p122 = por %p120, %p121
      %p123 = scmp.ne.s32.totalorder %s115, %s118
      %p124 = scmp.eq.s32.totalorder %s16, 0
      %p125 = por %p123, %p124
      %p126 = scmp.ne.s32.totalorder %s115, %s118
      %p127 = scmp.eq.s32.totalorder %s21, 3
      %p128 = por %p126, %p127
      %p129 = scmp.ne.s32.totalorder %s118, %s119
      %p130 = scmp.eq.s32.totalorder %s21, 0
      %p131 = por %p129, %p130
      %p132 = scmp.ne.s32.totalorder %s118, %s119
      %p133 = scmp.eq.s32.totalorder %s22, 3
      %p134 = por %p132, %p133
      %p136 = scmp.ne.s32.totalorder %s119, %s135
      %p137 = scmp.eq.s32.totalorder %s22, 0
      %p138 = por %p136, %p137
      %p139 = scmp.le.s32.totalorder 1, %s16
      %p140 = scmp.lt.s32.totalorder %s16, 5
      %p141 = pnand %p139, %p140
      %p142 = pneg %p141
      // Predicated region
      $region9: #{tpu_custom_call.1} parent=5 // pred_check
        _
      $region10: #{tpu_custom_call.1} parent=5 // pred_check_branch
        %144 = sbr.rel (%p141) target = $region12
      $region11: #{tpu_custom_call.1} parent=5 // pred_region
        %s145 = ssub.s32 %s16, 1
        // Predicated region
        $region13: #{tpu_custom_call.1} parent=11 // pred_check
          %p146 = pneg %p79
        $region14: #{tpu_custom_call.1} parent=11 // pred_check_branch
          %148 = sbr.rel (%p146) target = $region16
        $region15: #{tpu_custom_call.1} parent=11 // pred_region
          _
        $region16: #{tpu_custom_call.1} parent=11 // pred_fallthru
          _
      $region12: #{tpu_custom_call.1} parent=5 // pred_fallthru
        _
      %p149 = scmp.lt.s32.totalorder %s16, 4
      // Predicated region
      $region17: #{tpu_custom_call.1} parent=5 // pred_check
        %p150 = pneg %p149
      $region18: #{tpu_custom_call.1} parent=5 // pred_check_branch
        %152 = sbr.rel (%p150) target = $region20
      $region19: #{tpu_custom_call.1} parent=5 // pred_region
        // Predicated region
        $region21: #{tpu_custom_call.1} parent=19 // pred_check
          %p153 = pneg %p52
        $region22: #{tpu_custom_call.1} parent=19 // pred_check_branch
          %155 = sbr.rel (%p153) target = $region24
        $region23: #{tpu_custom_call.1} parent=19 // pred_region
          %s156 = sand.u32 %s42, 1
          %s157 = sand.u32 %s42, 1
          %s158 = smul.addr %s157, 64
          %s159 = scalar_lea.vmem [#allocation2], %s158
          %s160 = smul.u32 %s23, 2
          %s161 = sadd.s32 %s160, %s24
          %s162 = smul.u32 4, %s161
          %s163 = smul.addr %s162, 4
          %s164 = scalar_lea.vmem %s0, %s163
          // Predicated region
          $region25: #{tpu_custom_call.1} parent=23 // pred_check
            _
          $region26: #{tpu_custom_call.1} parent=23 // pred_check_branch
            %166 = sbr.rel (0) target = $region28
          $region27: #{tpu_custom_call.1} parent=23 // pred_region
            // Predicated region
            $region29: #{tpu_custom_call.1} parent=27 // pred_check
              _
            $region30: #{tpu_custom_call.1} parent=27 // pred_check_branch
              %168 = sbr.rel target = $region32
            $region31: #{tpu_custom_call.1} parent=27 // pred_region
              // Predicated region
              $region44: #{tpu_custom_call.1} parent=31 // pred_check
                _
              $region45: #{tpu_custom_call.1} parent=31 // pred_check_branch
                %214 = sbr.rel (0) target = $region47
              $region46: #{tpu_custom_call.1} parent=31 // pred_region
                loop: start=0, step=1, limit=1
                $region48: #{tpu_custom_call.1} parent=46 // loop_pre_header
                  _
                $region49: #{tpu_custom_call.1} parent=46 // loop_header
                  %s216 = sphi 0, %s220
                  %p217 = scmp.ge.s32.totalorder %s216, 1
                  %s221 = sphi %s164, %s164
                  %s222 = sphi %s159, %s159
                $region50: #{tpu_custom_call.1} parent=46 // loop_header_branch
                  %219 = sbr.rel (%p217) target = $region54
                $region51: #{tpu_custom_call.1} parent=46 // loop_body
                  _
                $region52: #{tpu_custom_call.1} parent=46 // loop_footer
                  %s220 = sadd.s32 1, %s216
                $region53: #{tpu_custom_call.1} parent=46 // loop_footer_branch
                  %215 = sbr.rel target = $region49
                $region54: #{tpu_custom_call.1} parent=46 // loop_exit
                  _
                %s224 = ssub.s32 16, 1
                loop: start=0, step=1, limit=1
                $region55: #{tpu_custom_call.1} parent=46 // loop_pre_header
                  _
                $region56: #{tpu_custom_call.1} parent=46 // loop_header
                  %s226 = sphi 0, %s230
                  %p227 = scmp.ge.s32.totalorder %s226, 1
                  %s231 = sphi %s164, %s164
                  %s232 = sphi %s159, %s159
                $region57: #{tpu_custom_call.1} parent=46 // loop_header_branch
                  %229 = sbr.rel (%p227) target = $region61
                $region58: #{tpu_custom_call.1} parent=46 // loop_body
                  %v233 = vld [vmem:[%s231] sm:%s224]
                  %234 = vst [vmem:[%s232] sm:%s224] %v233
                  %v235 = vld [vmem:[%s231 + $0x4] sm:%s224]
                  %236 = vst [vmem:[%s232 + $0x4] sm:%s224] %v235
                  %v237 = vld [vmem:[%s231 + $0x8] sm:%s224]
                  %238 = vst [vmem:[%s232 + $0x8] sm:%s224] %v237
                  %v239 = vld [vmem:[%s231 + $0xc] sm:%s224]
                  %240 = vst [vmem:[%s232 + $0xc] sm:%s224] %v239
                  %v241 = vld [vmem:[%s231 + $0x40] sm:%s224]
                  %242 = vst [vmem:[%s232 + $0x10] sm:%s224] %v241
                  %v243 = vld [vmem:[%s231 + $0x44] sm:%s224]
                  %244 = vst [vmem:[%s232 + $0x14] sm:%s224] %v243
                  %v245 = vld [vmem:[%s231 + $0x48] sm:%s224]
                  %246 = vst [vmem:[%s232 + $0x18] sm:%s224] %v245
                  %v247 = vld [vmem:[%s231 + $0x4c] sm:%s224]
                  %248 = vst [vmem:[%s232 + $0x1c] sm:%s224] %v247
                  %v249 = vld [vmem:[%s231 + $0x80] sm:%s224]
                  %250 = vst [vmem:[%s232 + $0x20] sm:%s224] %v249
                  %v251 = vld [vmem:[%s231 + $0x84] sm:%s224]
                  %252 = vst [vmem:[%s232 + $0x24] sm:%s224] %v251
                  %v253 = vld [vmem:[%s231 + $0x88] sm:%s224]
                  %254 = vst [vmem:[%s232 + $0x28] sm:%s224] %v253
                  %v255 = vld [vmem:[%s231 + $0x8c] sm:%s224]
                  %256 = vst [vmem:[%s232 + $0x2c] sm:%s224] %v255
                  %v257 = vld [vmem:[%s231 + $0xc0] sm:%s224]
                  %258 = vst [vmem:[%s232 + $0x30] sm:%s224] %v257
                  %v259 = vld [vmem:[%s231 + $0xc4] sm:%s224]
                  %260 = vst [vmem:[%s232 + $0x34] sm:%s224] %v259
                  %v261 = vld [vmem:[%s231 + $0xc8] sm:%s224]
                  %262 = vst [vmem:[%s232 + $0x38] sm:%s224] %v261
                  %v263 = vld [vmem:[%s231 + $0xcc] sm:%s224]
                  %264 = vst [vmem:[%s232 + $0x3c] sm:%s224] %v263
                $region59: #{tpu_custom_call.1} parent=46 // loop_footer
                  %s230 = sadd.s32 1, %s226
                $region60: #{tpu_custom_call.1} parent=46 // loop_footer_branch
                  %225 = sbr.rel target = $region56
                $region61: #{tpu_custom_call.1} parent=46 // loop_exit
                  _
              $region47: #{tpu_custom_call.1} parent=31 // pred_fallthru
                _
            $region32: #{tpu_custom_call.1} parent=27 // pred_fallthru
              _
            // Predicated region
            $region33: #{tpu_custom_call.1} parent=27 // pred_check
              _
            $region34: #{tpu_custom_call.1} parent=27 // pred_check_branch
              %170 = sbr.rel (0) target = $region36
            $region35: #{tpu_custom_call.1} parent=27 // pred_region
              %s172 = ssub.s32 16, 1
              loop: start=0, step=1, limit=1
              $region37: #{tpu_custom_call.1} parent=35 // loop_pre_header
                _
              $region38: #{tpu_custom_call.1} parent=35 // loop_header
                %s174 = sphi 0, %s178
                %p175 = scmp.ge.s32.totalorder %s174, 1
                %s179 = sphi %s164, %s164
                %s180 = sphi %s159, %s159
              $region39: #{tpu_custom_call.1} parent=35 // loop_header_branch
                %177 = sbr.rel (%p175) target = $region43
              $region40: #{tpu_custom_call.1} parent=35 // loop_body
                %v181 = vld [vmem:[%s179] sm:%s172]
                %182 = vst [vmem:[%s180] sm:%s172] %v181
                %v183 = vld [vmem:[%s179 + $0x4] sm:%s172]
                %184 = vst [vmem:[%s180 + $0x4] sm:%s172] %v183
                %v185 = vld [vmem:[%s179 + $0x8] sm:%s172]
                %186 = vst [vmem:[%s180 + $0x8] sm:%s172] %v185
                %v187 = vld [vmem:[%s179 + $0xc] sm:%s172]
                %188 = vst [vmem:[%s180 + $0xc] sm:%s172] %v187
                %v189 = vld [vmem:[%s179 + $0x40] sm:%s172]
                %190 = vst [vmem:[%s180 + $0x10] sm:%s172] %v189
                %v191 = vld [vmem:[%s179 + $0x44] sm:%s172]
                %192 = vst [vmem:[%s180 + $0x14] sm:%s172] %v191
                %v193 = vld [vmem:[%s179 + $0x48] sm:%s172]
                %194 = vst [vmem:[%s180 + $0x18] sm:%s172] %v193
                %v195 = vld [vmem:[%s179 + $0x4c] sm:%s172]
                %196 = vst [vmem:[%s180 + $0x1c] sm:%s172] %v195
                %v197 = vld [vmem:[%s179 + $0x80] sm:%s172]
                %198 = vst [vmem:[%s180 + $0x20] sm:%s172] %v197
                %v199 = vld [vmem:[%s179 + $0x84] sm:%s172]
                %200 = vst [vmem:[%s180 + $0x24] sm:%s172] %v199
                %v201 = vld [vmem:[%s179 + $0x88] sm:%s172]
                %202 = vst [vmem:[%s180 + $0x28] sm:%s172] %v201
                %v203 = vld [vmem:[%s179 + $0x8c] sm:%s172]
                %204 = vst [vmem:[%s180 + $0x2c] sm:%s172] %v203
                %v205 = vld [vmem:[%s179 + $0xc0] sm:%s172]
                %206 = vst [vmem:[%s180 + $0x30] sm:%s172] %v205
                %v207 = vld [vmem:[%s179 + $0xc4] sm:%s172]
                %208 = vst [vmem:[%s180 + $0x34] sm:%s172] %v207
                %v209 = vld [vmem:[%s179 + $0xc8] sm:%s172]
                %210 = vst [vmem:[%s180 + $0x38] sm:%s172] %v209
                %v211 = vld [vmem:[%s179 + $0xcc] sm:%s172]
                %212 = vst [vmem:[%s180 + $0x3c] sm:%s172] %v211
              $region41: #{tpu_custom_call.1} parent=35 // loop_footer
                %s178 = sadd.s32 1, %s174
              $region42: #{tpu_custom_call.1} parent=35 // loop_footer_branch
                %173 = sbr.rel target = $region38
              $region43: #{tpu_custom_call.1} parent=35 // loop_exit
                _
            $region36: #{tpu_custom_call.1} parent=27 // pred_fallthru
              _
          $region28: #{tpu_custom_call.1} parent=23 // pred_fallthru
            _
          %265 = vnop
        $region24: #{tpu_custom_call.1} parent=19 // pred_fallthru
          _
      $region20: #{tpu_custom_call.1} parent=5 // pred_fallthru
        _
      %p266 = scmp.le.s32.totalorder 1, %s16
      %p267 = scmp.lt.s32.totalorder %s16, 5
      %p268 = pnand %p266, %p267
      %p269 = pneg %p268
      // Predicated region
      $region62: #{tpu_custom_call.1} parent=5 // pred_check
        _
      $region63: #{tpu_custom_call.1} parent=5 // pred_check_branch
        %271 = sbr.rel (%p268) target = $region65
      $region64: #{tpu_custom_call.1} parent=5 // pred_region
        %s272 = ssub.s32 %s16, 1
        %s273 = sand.u32 %s45, 1
        %s274 = sand.u32 %s45, 1
        %s275 = smul.addr %s274, 64
        %s276 = scalar_lea.vmem [#allocation2], %s275
        // Predicated region
        $region66: #{tpu_custom_call.1} parent=64 // pred_check
          %p277 = pneg %p58
        $region67: #{tpu_custom_call.1} parent=64 // pred_check_branch
          %279 = sbr.rel (%p277) target = $region69
        $region68: #{tpu_custom_call.1} parent=64 // pred_region
          _
        $region69: #{tpu_custom_call.1} parent=64 // pred_fallthru
          _
        %s280 = sand.u32 %s45, 1
        %s281 = sand.u32 %s45, 1
        %s282 = smul.addr %s281, 64
        %s283 = scalar_lea.vmem [#allocation2], %s282
        %p284 = pneg %p58
        %p285 = pneg %p55
        %p286 = pneg %p79
        %p287 = pneg %p76
        %p288 = pneg %p105
        %p289 = pneg %p102
        %s290 = sand.u32 %s92, 1
        %s291 = scalar_lea.sflag [#allocation4], %s290
        %s292 = sand.u32 %s92, 1
        %s293 = smul.addr %s292, 8
        %s294 = scalar_lea.vmem [#allocation3], %s293
        %p295 = pneg %p131
        %p296 = pneg %p128
        %s297 = sand.u32 %s118, 1
        %s298 = scalar_lea.sflag [#allocation6], %s297
        %s299 = sand.u32 %s118, 1
        %s300 = smul.addr %s299, 8
        %s301 = scalar_lea.vmem [#allocation5], %s300
        %s302 = smul.u32 %s25, 2
        %s303 = sadd.s32 %s302, %s26
        %s304 = smul.u32 4, %s303
        %p306 = scmp.eq.s32.totalorder %s26, 0
        // Predicated region
        $region70: #{tpu_custom_call.1} parent=64 // pred_check
          %p307 = pneg %p306
        $region71: #{tpu_custom_call.1} parent=64 // pred_check_branch
          %309 = sbr.rel (%p307) target = $region73
        $region72: #{tpu_custom_call.1} parent=64 // pred_region
          %310 = vst [vmem:[%s294] sm:$0xff] 0.0
          %311 = vst [vmem:[%s301] sm:$0xff] 0.0
        $region73: #{tpu_custom_call.1} parent=64 // pred_fallthru
          _
        %v312 = vld [vmem:[%s276] sm:$0xf]
        %v313 = vld [vmem:[%s276 + $0x4] sm:$0xf]
        %v314 = vld [vmem:[%s276 + $0x8] sm:$0xf]
        %v315 = vld [vmem:[%s276 + $0xc] sm:$0xf]
        %v316 = vld [vmem:[%s276 + $0x10] sm:$0xf]
        %v317 = vld [vmem:[%s276 + $0x14] sm:$0xf]
        %v318 = vld [vmem:[%s276 + $0x18] sm:$0xf]
        %v319 = vld [vmem:[%s276 + $0x1c] sm:$0xf]
        %v320 = vld [vmem:[%s276 + $0x20] sm:$0xf]
        %v321 = vld [vmem:[%s276 + $0x24] sm:$0xf]
        %v322 = vld [vmem:[%s276 + $0x28] sm:$0xf]
        %v323 = vld [vmem:[%s276 + $0x2c] sm:$0xf]
        %v324 = vld [vmem:[%s276 + $0x30] sm:$0xf]
        %v325 = vld [vmem:[%s276 + $0x34] sm:$0xf]
        %v326 = vld [vmem:[%s276 + $0x38] sm:$0xf]
        %v327 = vld [vmem:[%s276 + $0x3c] sm:$0xf]
        %v328 = vld [vmem:[%s1] sm:$0xf]
        %v329 = vld [vmem:[%s1 + $0x4] sm:$0xf]
        %v330 = vld [vmem:[%s1 + $0x8] sm:$0xf]
        %v331 = vld [vmem:[%s1 + $0xc] sm:$0xf]
        %v332 = vld [vmem:[%s1 + $0x10] sm:$0x3]
        %v349 = vunpack.c.l.b16 %v312
        %v350 = vunpack.c.l.b16 %v313
        %v351 = vunpack.c.l.b16 %v314
        %v352 = vunpack.c.l.b16 %v315
        %v353 = vunpack.c.l.b16 %v316
        %v354 = vunpack.c.l.b16 %v317
        %v355 = vunpack.c.l.b16 %v318
        %v356 = vunpack.c.l.b16 %v319
        %v357 = vunpack.c.l.b16 %v320
        %v358 = vunpack.c.l.b16 %v321
        %v359 = vunpack.c.l.b16 %v322
        %v360 = vunpack.c.l.b16 %v323
        %v361 = vunpack.c.l.b16 %v324
        %v362 = vunpack.c.l.b16 %v325
        %v363 = vunpack.c.l.b16 %v326
        %v364 = vunpack.c.l.b16 %v327
        %v365 = vpack.c.b16 %v350, %v349
        %v366 = vpack.c.b16 %v352, %v351
        %v367 = vpack.c.b16 %v354, %v353
        %v368 = vpack.c.b16 %v356, %v355
        %v369 = vpack.c.b16 %v358, %v357
        %v370 = vpack.c.b16 %v360, %v359
        %v371 = vpack.c.b16 %v362, %v361
        %v372 = vpack.c.b16 %v364, %v363
        %v378 = vunpack.c.l.b16 %v328
        %v379 = vunpack.c.l.b16 %v329
        %v380 = vunpack.c.l.b16 %v330
        %v381 = vunpack.c.l.b16 %v331
        %v382 = vunpack.c.l.b16 %v332
        %v383 = vpack.c.b16 %v379, %v378
        %v384 = vpack.c.b16 %v381, %v380
        %v385 = vpack.c.b16 %v382, %v382
        %vm388 = vcmask 293888
        %v390 = vsel %vm388, %v365, 0
        %v393 = vsel %vm388, %v366, 0
        %v396 = vsel %vm388, %v367, 0
        %v399 = vsel %vm388, %v368, 0
        %v402 = vsel %vm388, %v369, 0
        %v405 = vsel %vm388, %v370, 0
        %v408 = vsel %vm388, %v371, 0
        %v411 = vsel %vm388, %v372, 0
        %vm413 = vcmask 1041408
        %v415 = vsel %vm413, %v385, 0
        %417 = vmatpush.bf16.msra.mxu0 0
        %418 = vmatpush.bf16.msra.mxu0 0
        %419 = vmatpush.bf16.msra.mxu0 0
        %420 = vmatpush.bf16.msra.mxu0 0
        %421 = vmatpush.bf16.msra.mxu0 0
        %422 = vmatpush.bf16.msra.mxu0 %v415
        %423 = vmatpush.bf16.msra.mxu0 %v384
        %424 = vmatpush.bf16.msra.mxu0 %v383
        %425 = vmatmul.bf16.gmra.mxu0 %v390
        %v426 = vpop.f32.mrf.mxu0
        %v427 = vadd.f32 0.0, %v426
        %v428 = vpop.f32.mrf.mxu0
        %v429 = vadd.f32 0.0, %v428
        %430 = vmatmul.bf16.gmra.mxu0 %v393
        %v431 = vpop.f32.mrf.mxu0
        %v432 = vadd.f32 0.0, %v431
        %v433 = vpop.f32.mrf.mxu0
        %v434 = vadd.f32 0.0, %v433
        %435 = vmatmul.bf16.gmra.mxu0 %v396
        %v436 = vpop.f32.mrf.mxu0
        %v437 = vadd.f32 0.0, %v436
        %v438 = vpop.f32.mrf.mxu0
        %v439 = vadd.f32 0.0, %v438
        %440 = vmatmul.bf16.gmra.mxu0 %v399
        %v441 = vpop.f32.mrf.mxu0
        %v442 = vadd.f32 0.0, %v441
        %v443 = vpop.f32.mrf.mxu0
        %v444 = vadd.f32 0.0, %v443
        %445 = vmatmul.bf16.gmra.mxu0 %v402
        %v446 = vpop.f32.mrf.mxu0
        %v447 = vadd.f32 0.0, %v446
        %v448 = vpop.f32.mrf.mxu0
        %v449 = vadd.f32 0.0, %v448
        %450 = vmatmul.bf16.gmra.mxu0 %v405
        %v451 = vpop.f32.mrf.mxu0
        %v452 = vadd.f32 0.0, %v451
        %v453 = vpop.f32.mrf.mxu0
        %v454 = vadd.f32 0.0, %v453
        %455 = vmatmul.bf16.gmra.mxu0 %v408
        %v456 = vpop.f32.mrf.mxu0
        %v457 = vadd.f32 0.0, %v456
        %v458 = vpop.f32.mrf.mxu0
        %v459 = vadd.f32 0.0, %v458
        %460 = vmatmul.bf16.gmra.mxu0 %v411
        %v461 = vpop.f32.mrf.mxu0
        %v462 = vadd.f32 0.0, %v461
        %v463 = vpop.f32.mrf.mxu0
        %v464 = vadd.f32 0.0, %v463
        %465 = vdwg.mxu0
        %v466 = vld [vmem:[%s294] sm:$0xff]
        %v467 = vadd.f32 %v427, %v429
        %v468 = vadd.f32 %v467, %v432
        %v469 = vadd.f32 %v468, %v434
        %v470 = vadd.f32 %v469, %v437
        %v471 = vadd.f32 %v470, %v439
        %v472 = vadd.f32 %v471, %v442
        %v473 = vadd.f32 %v472, %v444
        %v474 = vadd.f32 %v473, %v447
        %v475 = vadd.f32 %v474, %v449
        %v476 = vadd.f32 %v475, %v452
        %v477 = vadd.f32 %v476, %v454
        %v478 = vadd.f32 %v477, %v457
        %v479 = vadd.f32 %v478, %v459
        %v480 = vadd.f32 %v479, %v462
        %v481 = vadd.f32 %v480, %v464
        %v482 = vadd.f32 %v466, %v481
        %483 = vst [vmem:[%s294] sm:$0xff] %v482
        %v484 = vld [vmem:[%s301] sm:$0xff]
        %v485 = vmul.f32 %v427, %v427
        %v486 = vmul.f32 %v429, %v429
        %v487 = vmul.f32 %v432, %v432
        %v488 = vmul.f32 %v434, %v434
        %v489 = vmul.f32 %v437, %v437
        %v490 = vmul.f32 %v439, %v439
        %v491 = vmul.f32 %v442, %v442
        %v492 = vmul.f32 %v444, %v444
        %v493 = vmul.f32 %v447, %v447
        %v494 = vmul.f32 %v449, %v449
        %v495 = vmul.f32 %v452, %v452
        %v496 = vmul.f32 %v454, %v454
        %v497 = vmul.f32 %v457, %v457
        %v498 = vmul.f32 %v459, %v459
        %v499 = vmul.f32 %v462, %v462
        %v500 = vmul.f32 %v464, %v464
        %v501 = vadd.f32 %v485, %v486
        %v502 = vadd.f32 %v501, %v487
        %v503 = vadd.f32 %v502, %v488
        %v504 = vadd.f32 %v503, %v489
        %v505 = vadd.f32 %v504, %v490
        %v506 = vadd.f32 %v505, %v491
        %v507 = vadd.f32 %v506, %v492
        %v508 = vadd.f32 %v507, %v493
        %v509 = vadd.f32 %v508, %v494
        %v510 = vadd.f32 %v509, %v495
        %v511 = vadd.f32 %v510, %v496
        %v512 = vadd.f32 %v511, %v497
        %v513 = vadd.f32 %v512, %v498
        %v514 = vadd.f32 %v513, %v499
        %v515 = vadd.f32 %v514, %v500
        %v516 = vadd.f32 %v484, %v515
        %517 = vst [vmem:[%s301] sm:$0xff] %v516
        %s518 = sand.u32 %s92, 1
        %s519 = scalar_lea.sflag [#allocation4], %s518
        %s520 = sand.u32 %s92, 1
        %s521 = smul.addr %s520, 8
        %s522 = scalar_lea.vmem [#allocation3], %s521
        %s523 = sand.u32 %s118, 1
        %s524 = scalar_lea.sflag [#allocation6], %s523
        %s525 = sand.u32 %s118, 1
        %s526 = smul.addr %s525, 8
        %s527 = scalar_lea.vmem [#allocation5], %s526
        // Predicated region
        $region74: #{tpu_custom_call.1} parent=64 // pred_check
          %p528 = pneg %p102
        $region75: #{tpu_custom_call.1} parent=64 // pred_check_branch
          %530 = sbr.rel (%p528) target = $region77
        $region76: #{tpu_custom_call.1} parent=64 // pred_region
          %532 = vsyncadd %s519, 0
          %s533 = smul.addr %s25, 8
          %s534 = scalar_lea.hbm %s2, %s533
          %s536 = sshll.u32 %s522, 4
          %s537 = int_to_ptr.vmem [resolvable:$true] %s536
          %s538 = sshll.u32 %s534, 4
          %s539 = int_to_ptr.hbm [resolvable:$true] %s538
          %541 = dma.vmem_to_hbm [thread:$0]  %s537, 128, %s539, %s519
        $region77: #{tpu_custom_call.1} parent=64 // pred_fallthru
          _
        // Predicated region
        $region78: #{tpu_custom_call.1} parent=64 // pred_check
          %p542 = pneg %p128
        $region79: #{tpu_custom_call.1} parent=64 // pred_check_branch
          %544 = sbr.rel (%p542) target = $region81
        $region80: #{tpu_custom_call.1} parent=64 // pred_region
          %546 = vsyncadd %s524, 0
          %s547 = smul.addr %s25, 8
          %s548 = scalar_lea.hbm %s3, %s547
          %s550 = sshll.u32 %s527, 4
          %s551 = int_to_ptr.vmem [resolvable:$true] %s550
          %s552 = sshll.u32 %s548, 4
          %s553 = int_to_ptr.hbm [resolvable:$true] %s552
          %555 = dma.vmem_to_hbm [thread:$0]  %s551, 128, %s553, %s524
        $region81: #{tpu_custom_call.1} parent=64 // pred_fallthru
          _
      $region65: #{tpu_custom_call.1} parent=5 // pred_fallthru
        _
      %p556 = scmp.le.s32.totalorder 2, %s16
      // Predicated region
      $region82: #{tpu_custom_call.1} parent=5 // pred_check
        %p557 = pneg %p556
      $region83: #{tpu_custom_call.1} parent=5 // pred_check_branch
        %559 = sbr.rel (%p557) target = $region85
      $region84: #{tpu_custom_call.1} parent=5 // pred_region
        %s560 = ssub.s32 %s16, 2
        // Predicated region
        $region86: #{tpu_custom_call.1} parent=84 // pred_check
          %p561 = pneg %p108
        $region87: #{tpu_custom_call.1} parent=84 // pred_check_branch
          %563 = sbr.rel (%p561) target = $region89
        $region88: #{tpu_custom_call.1} parent=84 // pred_region
          %s564 = sand.u32 %s93, 1
          %s565 = scalar_lea.sflag [#allocation4], %s564
          %s566 = sand.u32 %s93, 1
          %s567 = smul.addr %s566, 8
          %s568 = scalar_lea.vmem [#allocation3], %s567
          %570 = dma.done %s565, 128
        $region89: #{tpu_custom_call.1} parent=84 // pred_fallthru
          _
        // Predicated region
        $region90: #{tpu_custom_call.1} parent=84 // pred_check
          %p571 = pneg %p134
        $region91: #{tpu_custom_call.1} parent=84 // pred_check_branch
          %573 = sbr.rel (%p571) target = $region93
        $region92: #{tpu_custom_call.1} parent=84 // pred_region
          %s574 = sand.u32 %s119, 1
          %s575 = scalar_lea.sflag [#allocation6], %s574
          %s576 = sand.u32 %s119, 1
          %s577 = smul.addr %s576, 8
          %s578 = scalar_lea.vmem [#allocation5], %s577
          %580 = dma.done %s575, 128
        $region93: #{tpu_custom_call.1} parent=84 // pred_fallthru
          _
      $region85: #{tpu_custom_call.1} parent=5 // pred_fallthru
        _
    $region6: #{tpu_custom_call.1} parent=1 // loop_footer
      %s20 = sadd.s32 1, %s16
    $region7: #{tpu_custom_call.1} parent=1 // loop_footer_branch
      %15 = sbr.rel target = $region3
    $region8: #{tpu_custom_call.1} parent=1 // loop_exit
      _
    %581 = vsyncpa [#allocation4], 1
    %s582 = scalar_lea.sflag [#allocation4], 1
    %583 = vsyncpa %s582, 1
    %584 = vsyncpa [#allocation6], 1
    %s585 = scalar_lea.sflag [#allocation6], 1
    %586 = vsyncpa %s585, 1

</llo_original>
